<compile_context>
chip_gen: v5e
topology: v5e:2x2
jax: 0.10.0
libtpu: 0.0.40
codegen_flags: <defaults>
</compile_context>

<pallas_src>
import functools

import jax
import jax.numpy as jnp
from jax.experimental import pallas as pl
from jax.experimental.pallas import tpu as pltpu


def _round_up(n, m):
    return ((n + m - 1) // m) * m


def _stddev_kernel(inv_d, inv_dm1, x_ref, s_ref, o_ref):
    # x_ref: (ROW_TILE, T)      flattened (batch*channel) rows
    # s_ref: (T, W_pad)         banded 0/1 window-membership matrix (resident,
    #                           constant index_map -> not re-DMA'd per step)
    # o_ref: (ROW_TILE, W_pad)  lane-dense output tile
    x = x_ref[...].astype(jnp.float32)          # cast in VMEM, not in HBM
    s = s_ref[...]
    sum_w = jnp.dot(x, s, preferred_element_type=jnp.float32)        # (R, Wp)
    sumsq_w = jnp.dot(x * x, s, preferred_element_type=jnp.float32)  # (R, Wp)
    mean = sum_w * inv_d
    var = (sumsq_w - sum_w * mean) * inv_dm1     # unbiased (ddof=1), like torch.std
    var = jnp.maximum(var, 0.0)                  # guard tiny negative round-off
    o_ref[...] = jnp.sqrt(var).astype(o_ref.dtype)


def ts_stddev(x, d=10, stride=10):
    """Pallas TPU forward for the PyTorch ts_stddev module."""
    B, C, T = x.shape
    assert T >= d, "window size d must not exceed the time dimension"
    assert d >= 2, "unbiased std needs at least 2 elements per window"
    W = (T - d) // stride + 1
    R = B * C

    # Lane-dense padded output width (multiple of 128; zero-padded S columns).
    W_pad = _round_up(W, 128)
    # Row tile: multiple of 8 sublanes, large enough to amortize per-step
    # overhead, capped so the double-buffered tiles stay well inside VMEM
    # (also on v7x's 64 MiB).
    ROW_TILE = min(512, _round_up(R, 8))
    R_pad = _round_up(R, ROW_TILE)

    x2 = x.reshape(R, T)
    if R_pad != R:
        x2 = jnp.pad(x2, ((0, R_pad - R), (0, 0)))

    # Banded window-membership matrix: S[t, w] = 1 iff t lies in window w.
    t_idx = jnp.arange(T, dtype=jnp.int32)[:, None]
    w_idx = jnp.arange(W_pad, dtype=jnp.int32)[None, :]
    in_window = (w_idx < W) & (t_idx >= w_idx * stride) & (t_idx < w_idx * stride + d)
    S = in_window.astype(jnp.float32)

    kernel = functools.partial(_stddev_kernel, 1.0 / d, 1.0 / (d - 1))

    # TODO(synk): for very large T, add a reduction grid axis over T-chunks
    # (multiple of stride) with an f32 accumulator scratch (P3 pattern).
    out = pl.pallas_call(
        kernel,
        out_shape=jax.ShapeDtypeStruct((R_pad, W_pad), jnp.float32),
        grid_spec=pltpu.PrefetchScalarGridSpec(
            num_scalar_prefetch=0,
            grid=(R_pad // ROW_TILE,),
            in_specs=[
                pl.BlockSpec((ROW_TILE, T), lambda i: (i, 0)),
                pl.BlockSpec((T, W_pad), lambda i: (0, 0)),
            ],
            out_specs=pl.BlockSpec((ROW_TILE, W_pad), lambda i: (i, 0)),
        ),
        compiler_params=pltpu.CompilerParams(
            dimension_semantics=("parallel",)),
    )(x2, S)

    return out[:R, :W].reshape(B, C, W)


def _reference(x, d=10, stride=10):
    # Pure-JAX reference mirroring torch unfold + torch.std (unbiased, dim=3).
    B, C, T = x.shape
    W = (T - d) // stride + 1
    windows = jnp.stack(
        [x[:, :, w * stride:w * stride + d] for w in range(W)], axis=2
    )  # (B, C, W, d)
    return jnp.std(windows.astype(jnp.float32), axis=-1, ddof=1)


if __name__ == "__main__":
    d, stride = 10, 10
    B, C, T = 2, 4, 40  # 4 windows
    key = jax.random.PRNGKey(0)
    x = jax.random.normal(key, (B, C, T), dtype=jnp.float32)

    out = ts_stddev(x, d=d, stride=stride)
    out = jax.block_until_ready(out)

    ref = _reference(x, d=d, stride=stride)
    assert out.shape == ref.shape == (B, C, (T - d) // stride + 1)
    assert jnp.allclose(out, ref, atol=1e-4, rtol=1e-4), float(
        jnp.max(jnp.abs(out - ref)))

    print("KERNEL_OK")
</pallas_src>

<mosaic_0001>
module attributes {stable_mosaic.version = 11 : i64} {
  func.func @_stddev_kernel(%arg0: i32, %arg1: memref<8x40xf32, #tpu.memory_space<vmem>>, %arg2: memref<40x128xf32, #tpu.memory_space<vmem>>, %arg3: memref<8x128xf32, #tpu.memory_space<vmem>>) attributes {dimension_semantics = [#tpu.dimension_semantics<parallel>], iteration_bounds = array<i64: 1>, scalar_prefetch = 0 : i64, scratch_operands = 0 : i64, tpu.core_type = #tpu.core_type<tc>, window_params = [{transform_indices = @transform_0, window_bounds = array<i64: 8, 40>}, {pipeline_mode = #tpu.pipeline_mode<synchronous>, transform_indices = @transform_1, window_bounds = array<i64: 40, 128>}, {transform_indices = @transform_2, window_bounds = array<i64: 8, 128>}]} {
    %c0 = arith.constant 0 : index
    %c0_0 = arith.constant 0 : index
    %0 = vector.load %arg1[%c0, %c0_0] : memref<8x40xf32, #tpu.memory_space<vmem>>, vector<8x40xf32>
    %c0_1 = arith.constant 0 : index
    %c0_2 = arith.constant 0 : index
    %1 = vector.load %arg2[%c0_1, %c0_2] : memref<40x128xf32, #tpu.memory_space<vmem>>, vector<40x128xf32>
    %cst = arith.constant dense<0.000000e+00> : vector<8x128xf32>
    %2 = tpu.matmul %0, %1, %cst {dimension_numbers = #tpu.dot_dimension_numbers<[1], [0], [0], [1], [0, 0, 1, 1], [], []>} : vector<8x40xf32>, vector<40x128xf32>, vector<8x128xf32> -> vector<8x128xf32>
    %3 = arith.mulf %0, %0 : vector<8x40xf32>
    %cst_3 = arith.constant dense<0.000000e+00> : vector<8x128xf32>
    %4 = tpu.matmul %3, %1, %cst_3 {dimension_numbers = #tpu.dot_dimension_numbers<[1], [0], [0], [1], [0, 0, 1, 1], [], []>} : vector<8x40xf32>, vector<40x128xf32>, vector<8x128xf32> -> vector<8x128xf32>
    %cst_4 = arith.constant 1.000000e-01 : f32
    %5 = vector.broadcast %cst_4 : f32 to vector<8x128xf32>
    %6 = arith.mulf %2, %5 : vector<8x128xf32>
    %7 = arith.mulf %2, %6 : vector<8x128xf32>
    %8 = arith.subf %4, %7 : vector<8x128xf32>
    %cst_5 = arith.constant 0.111111112 : f32
    %9 = vector.broadcast %cst_5 : f32 to vector<8x128xf32>
    %10 = arith.mulf %8, %9 : vector<8x128xf32>
    %cst_6 = arith.constant 0.000000e+00 : f32
    %11 = vector.broadcast %cst_6 : f32 to vector<8x128xf32>
    %12 = arith.maximumf %10, %11 : vector<8x128xf32>
    %13 = math.sqrt %12 : vector<8x128xf32>
    %c0_7 = arith.constant 0 : index
    %c0_8 = arith.constant 0 : index
    %14 = vector.load %arg3[%c0_7, %c0_8] : memref<8x128xf32, #tpu.memory_space<vmem>>, vector<8x128xf32>
    tpu.vector_store %arg3[%c0_7, %c0_8], %13 {strides = array<i32>} : memref<8x128xf32, #tpu.memory_space<vmem>>, vector<8x128xf32>,
    return
  }
  func.func @transform_0(%arg0: i32) -> (i32, i32) {
    %c0_i32 = arith.constant 0 : i32
    %c0_i32_0 = arith.constant 0 : i32
    return %arg0, %c0_i32 : i32, i32
  }
  func.func @transform_1(%arg0: i32) -> (i32, i32) {
    %c0_i32 = arith.constant 0 : i32
    %c0_i32_0 = arith.constant 0 : i32
    %c0_i32_1 = arith.constant 0 : i32
    return %c0_i32, %c0_i32_0 : i32, i32
  }
  func.func @transform_2(%arg0: i32) -> (i32, i32) {
    %c0_i32 = arith.constant 0 : i32
    %c0_i32_0 = arith.constant 0 : i32
    return %arg0, %c0_i32 : i32, i32
  }
}

</mosaic_0001>

<llo_original>
// kernel: tpu_custom_call.1
$region0: #{tpu_custom_call.1}
  #allocation0 [shape = 'u32[]', space=smem, size = 0x4, offset = 0x4, fixed_abs, tag = 'smem constant byte address 0x4 - core index']
  #allocation1 [shape = 'u32[72,128]{1,0:T(1,128)}', space=vmem, size = 0x9000, scoped, tag = 'internal scratch']
  %s0 = inlined_call_operand.hbm [shape: f32[8,40], index: 0, kind: input, shape index: {}]
  %s1 = inlined_call_operand.hbm [shape: f32[40,128], index: 1, kind: input, shape index: {}]
  %s2 = inlined_call_operand.hbm [shape: f32[8,128], index: 2, kind: output, shape index: {}]
  %s3 = sld [smem:[#allocation0]]
  $region26: #{tpu_custom_call.1} parent=0
    _
  %s5 = ssub.s32 1, %s3
  %s6 = scalar_select 0, %s5, %s3
  $region1: #{tpu_custom_call.1} parent=0
    #allocation2 [shape = 'u8[4096]{0}', space=vmem, size = 0x1000, scoped, tag = 'input window, operand 0, single buffered']
    #allocation3 [shape = 's32[1]{0}', space=sflag, size = 0x4, scoped, tag = 'scoped memory for tpu_custom_call.1']
    #allocation4 [shape = 's32[1]{0}', space=sflag, size = 0x4, scoped, tag = 'scoped memory for tpu_custom_call.1']
    #allocation5 [shape = 'u8[20480]{0}', space=vmem, size = 0x5000, scoped, tag = 'input window, operand 1, single buffered']
    #allocation6 [shape = 's32[1]{0}', space=sflag, size = 0x4, scoped, tag = 'scoped memory for tpu_custom_call.1']
    #allocation7 [shape = 'u8[4096]{0}', space=vmem, size = 0x1000, scoped, tag = 'output window, operand 0, single buffered']
    %7 = vsyncpa [#allocation3], 0
    %8 = vsyncpa [#allocation6], 0
    %9 = vsyncpa [#allocation4], 0
    // Predicated region
    $region2: #{tpu_custom_call.1} parent=1 // pred_check
      _
    $region3: #{tpu_custom_call.1} parent=1 // pred_check_branch
      %11 = sbr.rel (0) target = $region5
    $region4: #{tpu_custom_call.1} parent=1 // pred_region
      %13 = vsyncadd [#allocation3], 0
      %s15 = sshll.u32 %s0, 4
      %s16 = int_to_ptr.hbm [resolvable:$true] %s15
      %s17 = sshll.u32 [#allocation2], 4
      %s18 = int_to_ptr.vmem [resolvable:$true] %s17
      %20 = dma.hbm_to_vmem [thread:$0]  %s16, 128, %s18, [#allocation3]
    $region5: #{tpu_custom_call.1} parent=1 // pred_fallthru
      _
    // Predicated region
    $region6: #{tpu_custom_call.1} parent=1 // pred_check
      _
    $region7: #{tpu_custom_call.1} parent=1 // pred_check_branch
      %22 = sbr.rel (0) target = $region9
    $region8: #{tpu_custom_call.1} parent=1 // pred_region
      %24 = vsyncadd [#allocation6], 0
      %s25 = sshll.u32 %s1, 4
      %s26 = int_to_ptr.hbm [resolvable:$true] %s25
      %s27 = sshll.u32 [#allocation5], 4
      %s28 = int_to_ptr.vmem [resolvable:$true] %s27
      %33 = dma.hbm_to_vmem [thread:$0]  %s26, 640, %s28, [#allocation6], 128, 128, 8
    $region9: #{tpu_custom_call.1} parent=1 // pred_fallthru
      _
    // Predicated region
    $region10: #{tpu_custom_call.1} parent=1 // pred_check
      _
    $region11: #{tpu_custom_call.1} parent=1 // pred_check_branch
      %35 = sbr.rel (0) target = $region13
    $region12: #{tpu_custom_call.1} parent=1 // pred_region
      %37 = dma.done [#allocation3], 128
    $region13: #{tpu_custom_call.1} parent=1 // pred_fallthru
      _
    // Predicated region
    $region14: #{tpu_custom_call.1} parent=1 // pred_check
      _
    $region15: #{tpu_custom_call.1} parent=1 // pred_check_branch
      %39 = sbr.rel (0) target = $region17
    $region16: #{tpu_custom_call.1} parent=1 // pred_region
      %41 = dma.done [#allocation6], 640
    $region17: #{tpu_custom_call.1} parent=1 // pred_fallthru
      _
    %v42 = vld [vmem:[#allocation2] sm:$0xff]
    %v43 = vld [vmem:[#allocation5] sm:$0xff]
    %v44 = vld [vmem:[#allocation5 + $0x8] sm:$0xff]
    %v45 = vld [vmem:[#allocation5 + $0x10] sm:$0xff]
    %v46 = vld [vmem:[#allocation5 + $0x18] sm:$0xff]
    %v47 = vld [vmem:[#allocation5 + $0x20] sm:$0xff]
    %vm48 = vcmask 326656
    %v50 = vsel %vm48, %v42, 0
    %52 = vmatpush.msra.mxu0 0.0
    %53 = vmatpush.msra.mxu0 0.0
    %54 = vmatpush.msra.mxu0 0.0
    %55 = vmatpush.msra.mxu0 0.0
    %56 = vmatpush.msra.mxu0 0.0
    %57 = vmatpush.msra.mxu0 0.0
    %58 = vmatpush.msra.mxu0 0.0
    %59 = vmatpush.msra.mxu0 0.0
    %60 = vmatpush.msra.mxu0 0.0
    %61 = vmatpush.msra.mxu0 0.0
    %62 = vmatpush.msra.mxu0 0.0
    %63 = vmatpush.msra.mxu0 %v47
    %64 = vmatpush.msra.mxu0 %v46
    %65 = vmatpush.msra.mxu0 %v45
    %66 = vmatpush.msra.mxu0 %v44
    %67 = vmatpush.msra.mxu0 %v43
    %68 = vmatmul.f32.gmra.mxu0 %v50
    %v69 = vpop.f32.mrf.mxu0
    %v70 = vadd.f32 0.0, %v69
    %71 = vdwg.mxu0
    %v72 = vmul.f32 %v42, %v42
    %v74 = vsel %vm48, %v72, 0
    %76 = vmatpush.msra.mxu0 0.0
    %77 = vmatpush.msra.mxu0 0.0
    %78 = vmatpush.msra.mxu0 0.0
    %79 = vmatpush.msra.mxu0 0.0
    %80 = vmatpush.msra.mxu0 0.0
    %81 = vmatpush.msra.mxu0 0.0
    %82 = vmatpush.msra.mxu0 0.0
    %83 = vmatpush.msra.mxu0 0.0
    %84 = vmatpush.msra.mxu0 0.0
    %85 = vmatpush.msra.mxu0 0.0
    %86 = vmatpush.msra.mxu0 0.0
    %87 = vmatpush.msra.mxu0 %v47
    %88 = vmatpush.msra.mxu0 %v46
    %89 = vmatpush.msra.mxu0 %v45
    %90 = vmatpush.msra.mxu0 %v44
    %91 = vmatpush.msra.mxu0 %v43
    %92 = vmatmul.f32.gmra.mxu0 %v74
    %v93 = vpop.f32.mrf.mxu0
    %v94 = vadd.f32 0.0, %v93
    %95 = vdwg.mxu0
    %v96 = vmul.f32 %v70, 0.1
    %v97 = vmul.f32 %v70, %v96
    %v98 = vsub.f32 %v94, %v97
    %v99 = vmul.f32 %v98, 0.11111111
    %v100 = vmax.f32 %v99, 0.0
    %v101 = vrsqrt.pop %v100
    %v102 = vmul.f32 %v101, %v100
    %v103 = vmul.f32 %v102, %v101
    %v104 = vmul.f32 0.5, %v103
    %v105 = vsub.f32 1.5, %v104
    %v106 = vmul.f32 %v101, %v105
    %v107 = vmul.f32 %v100, %v106
    %vm108 = vcmp.eq.f32.partialorder %v100, inf
    %v109 = vsel %vm108, %v100, %v107
    %vm110 = vcmp.eq.f32.partialorder %v100, 0.0
    %v111 = vand.u32 %v100, 2147483648
    %v112 = vsel %vm110, %v111, %v109
    %113 = vst [vmem:[#allocation7] sm:$0xff] %v112
    // Predicated region
    $region18: #{tpu_custom_call.1} parent=1 // pred_check
      _
    $region19: #{tpu_custom_call.1} parent=1 // pred_check_branch
      %115 = sbr.rel (0) target = $region21
    $region20: #{tpu_custom_call.1} parent=1 // pred_region
      %117 = vsyncadd [#allocation4], 0
      %s119 = sshll.u32 [#allocation7], 4
      %s120 = int_to_ptr.vmem [resolvable:$true] %s119
      %s121 = sshll.u32 %s2, 4
      %s122 = int_to_ptr.hbm [resolvable:$true] %s121
      %124 = dma.vmem_to_hbm [thread:$0]  %s120, 128, %s122, [#allocation4]
    $region21: #{tpu_custom_call.1} parent=1 // pred_fallthru
      _
    // Predicated region
    $region22: #{tpu_custom_call.1} parent=1 // pred_check
      _
    $region23: #{tpu_custom_call.1} parent=1 // pred_check_branch
      %126 = sbr.rel (0) target = $region25
    $region24: #{tpu_custom_call.1} parent=1 // pred_region
      %128 = dma.done [#allocation4], 128
    $region25: #{tpu_custom_call.1} parent=1 // pred_fallthru
      _
    %129 = vsyncpa [#allocation3], 1
    %130 = vsyncpa [#allocation6], 1
    %131 = vsyncpa [#allocation4], 1

</llo_original>
